<compile_context>
chip_gen: v5e
topology: v5e:2x2
jax: 0.10.0
libtpu: 0.0.40
codegen_flags: <defaults>
</compile_context>

<pallas_src>
import functools

import numpy as np
import jax
import jax.numpy as jnp
from jax.experimental import pallas as pl
from jax.experimental.pallas import tpu as pltpu

EMBEDDING_DIM = 100
M = 64
SQRT_M = 8.0

E_PAD = 128                  # embedding dim 100 -> 128 lanes (zero padded, exact)
M_PAD = 128                  # each 64-wide Q/K head -> 128 lanes (zero padded, exact)
BT_MAX = 256                 # batch elements per grid step
FUSE_GATHER_MAX_VOCAB = 512  # in-kernel one-hot gather only for small vocabularies
VMEM_LIMIT_BYTES = 32 * 1024 * 1024  # explicit: v5e scoped-VMEM default is only 16 MiB


def _attention_core(embeds, wqk, vcol, out_ref, bt, seq_len):
    """Shared attention + classifier core for one batch block.

    embeds : (bt*seq_len, E_PAD) bf16  -- gathered word embeddings
    wqk    : (E_PAD, 2*M_PAD)    bf16  -- [w_q | w_k], each zero padded to 128 lanes
    vcol   : (1, E_PAD)          f32   -- w_v @ mat @ weights (folded value path)
    out_ref: (1, 1, bt)          f32   -- lane-dense per-element logits
    """
    # Single wide Q/K projection for the whole block (bf16 in, f32 MXU accumulation).
    qk = jnp.dot(embeds, wqk, preferred_element_type=jnp.float32)       # (rows, 256)

    # 128-lane aligned slices; cast to bf16 so the batched scores contraction is a
    # single-pass bf16 MXU op (review #2).
    mq = qk[:, 0 * M_PAD:1 * M_PAD].astype(jnp.bfloat16).reshape(bt, seq_len, M_PAD)
    mk = qk[:, 1 * M_PAD:2 * M_PAD].astype(jnp.bfloat16).reshape(bt, seq_len, M_PAD)

    # Transposed scores: scoresT[b, t, s] = k_t . q_s   (keys t on sublanes).
    # Zero-padded M lanes contribute nothing -> numerically exact.
    # TODO(synk): this batched einsum is still Bt tiny MXU matmuls per step; if it
    # shows up as the binding vext slot, move it to VPU+XLU or a batch-on-lanes
    # layout (review #3 / #8).
    scoresT = jnp.einsum("btm,bsm->bts", mk, mq,
                         preferred_element_type=jnp.float32) * (1.0 / SQRT_M)

    # Softmax over keys (PyTorch softmax dim=1) == axis 1 here: sublane reductions.
    smax = jnp.max(scoresT, axis=1, keepdims=True)                      # (bt, 1, S)
    p = jnp.exp(scoresT - smax)
    denom = jnp.sum(p, axis=1, keepdims=True)
    sfT = p * pl.reciprocal(denom, approx=True)                         # (bt, S, S)

    # V-path fold (review #1):
    #   logit[b] = (1/S) * sum_t (sum_s SF[b,s,t]) * (embeds[b,t,:] @ v_col)
    # g and the embeddings share the keys-on-sublanes layout, so this is a plain
    # broadcast multiply + reduce (no batched matmul, no relayout).
    g = jnp.sum(sfT, axis=2, keepdims=True)                             # (bt, S, 1)
    emb3 = embeds.reshape(bt, seq_len, E_PAD)
    z = jnp.sum(emb3 * g, axis=1)                                       # (bt, E_PAD) f32

    # Contract the lane axis of both operands -> lane-dense (1, bt) logits row.
    prod = jnp.einsum("oe,be->ob", vcol, z,
                      preferred_element_type=jnp.float32)               # (1, bt)
    out_ref[...] = (prod * (1.0 / seq_len)).reshape(1, 1, bt)


def _gather_attn_kernel(idx_ref, table_ref, wqk_ref, vcol_ref, out_ref, *,
                        seq_len, vocab_pad):
    """Fused path: in-kernel embedding gather (exact one-hot MXU matmul) + attention."""
    rows = idx_ref.shape[0]
    bt = rows // seq_len
    vocab_iota = jax.lax.broadcasted_iota(jnp.int32, (rows, vocab_pad), 1)
    onehot = (idx_ref[...] == vocab_iota).astype(jnp.bfloat16)          # (rows, Vp)
    # One-hot row picks exactly one bf16 table row -> result is exact.
    embeds = jnp.dot(onehot, table_ref[...],
                     preferred_element_type=jnp.float32).astype(jnp.bfloat16)
    _attention_core(embeds, wqk_ref[...], vcol_ref[...], out_ref, bt, seq_len)


def _embeds_attn_kernel(embeds_ref, wqk_ref, vcol_ref, out_ref, *, seq_len):
    """Fallback path (large vocab): embeddings gathered by XLA, streamed in bf16."""
    rows = embeds_ref.shape[0]
    bt = rows // seq_len
    _attention_core(embeds_ref[...], wqk_ref[...], vcol_ref[...], out_ref, bt, seq_len)


def _round_up(x, m):
    return ((x + m - 1) // m) * m


def binary_classifier_forward(batch_word_idxs, params):
    """batch_word_idxs: (B, S) int word indices -> (B, 1) f32 logits."""
    B, S = batch_word_idxs.shape
    assert S % 8 == 0, "sequence length must be sublane (8) aligned"
    # TODO(synk): ragged / non-multiple-of-8 sequence lengths would need key
    # masking inside the softmax; not implemented.

    emb = params["embeddings"]
    V, E = emb.shape
    assert E <= E_PAD and params["w_q"].shape[1] <= M_PAD

    # ---- parameter packing ---------------------------------------------------
    def _pad_head(w):                       # (E, M) -> (E_PAD, M_PAD), zero pad
        return jnp.pad(w, ((0, E_PAD - w.shape[0]), (0, M_PAD - w.shape[1])))

    w_qk = jnp.concatenate([_pad_head(params["w_q"]), _pad_head(params["w_k"])],
                           axis=1).astype(jnp.bfloat16)                  # (128, 256)

    # Folded value path: v_col = w_v @ (mat @ weights)   (exact algebra, kept f32).
    v_col = (params["w_v"] @ (params["mat"] @ params["weights"])).reshape(1, E)
    v_col = jnp.pad(v_col, ((0, 0), (0, E_PAD - E))).astype(jnp.float32)  # (1, 128)

    # ---- batch blocking --------------------------------------------------------
    b8 = _round_up(B, 8)
    bt = min(BT_MAX, b8)
    if 16 <= b8 <= BT_MAX:
        bt = _round_up(b8 // 2, 8)          # keep >= 2 parallel steps (v7x megacore)
    nb = pl.cdiv(B, bt)
    b_pad = nb * bt

    idx = batch_word_idxs.astype(jnp.int32)
    if b_pad != B:
        # Padding rows gather word 0 -> finite logits, sliced off at the end.
        idx = jnp.pad(idx, ((0, b_pad - B), (0, 0)))

    compiler_params = pltpu.CompilerParams(
        dimension_semantics=("parallel",),
        vmem_limit_bytes=VMEM_LIMIT_BYTES)
    out_shape = jax.ShapeDtypeStruct((nb, 1, bt), jnp.float32)
    out_spec = pl.BlockSpec((1, 1, bt), lambda b: (b, 0, 0))

    if V <= FUSE_GATHER_MAX_VOCAB:
        # Fused gather: ship indices (4 B/word) instead of activations (256 B/word).
        v_pad = _round_up(V, 128)
        table = jnp.pad(emb, ((0, v_pad - V), (0, E_PAD - E))).astype(jnp.bfloat16)
        idx_col = idx.reshape(b_pad * S, 1)
        kernel = functools.partial(_gather_attn_kernel, seq_len=S, vocab_pad=v_pad)
        out = pl.pallas_call(
            kernel,
            out_shape=out_shape,
            grid_spec=pltpu.PrefetchScalarGridSpec(
                num_scalar_prefetch=0,
                grid=(nb,),
                in_specs=[
                    pl.BlockSpec((bt * S, 1), lambda b: (b, 0)),          # indices
                    pl.BlockSpec((v_pad, E_PAD), lambda b: (0, 0)),       # table (VMEM resident)
                    pl.BlockSpec((E_PAD, 2 * M_PAD), lambda b: (0, 0)),   # [w_q | w_k]
                    pl.BlockSpec((1, E_PAD), lambda b: (0, 0)),           # folded v_col
                ],
                out_specs=out_spec),
            compiler_params=compiler_params,
        )(idx_col, table, w_qk, v_col)
    else:
        # Large vocab: gather with XLA, stream bf16 activations (previous behaviour).
        emb_pad = jnp.pad(emb, ((0, 0), (0, E_PAD - E))).astype(jnp.bfloat16)
        embeds = jnp.take(emb_pad, idx, axis=0).reshape(b_pad * S, E_PAD)
        kernel = functools.partial(_embeds_attn_kernel, seq_len=S)
        out = pl.pallas_call(
            kernel,
            out_shape=out_shape,
            grid_spec=pltpu.PrefetchScalarGridSpec(
                num_scalar_prefetch=0,
                grid=(nb,),
                in_specs=[
                    pl.BlockSpec((bt * S, E_PAD), lambda b: (b, 0)),
                    pl.BlockSpec((E_PAD, 2 * M_PAD), lambda b: (0, 0)),
                    pl.BlockSpec((1, E_PAD), lambda b: (0, 0)),
                ],
                out_specs=out_spec),
            compiler_params=compiler_params,
        )(embeds, w_qk, v_col)

    return out.reshape(b_pad, 1)[:B]


def make_params(corpus_size, embedding_dim=EMBEDDING_DIM):
    # Deterministic init mirroring the PyTorch module's __init__.
    np.random.seed(100)
    all_embeds = np.random.uniform(-1.0, 1.0, (corpus_size, embedding_dim))
    return {
        "embeddings": jnp.asarray(all_embeds, dtype=jnp.float32),
        "weights": jnp.ones((embedding_dim, 1), dtype=jnp.float32),
        "w_q": jnp.ones((embedding_dim, M), dtype=jnp.float32),
        "w_k": jnp.ones((embedding_dim, M), dtype=jnp.float32),
        "w_v": jnp.ones((embedding_dim, M), dtype=jnp.float32),
        "mat": jnp.ones((M, embedding_dim), dtype=jnp.float32),
    }


def reference_forward(batch_word_idxs, params):
    # Pure-JAX reference mirroring the PyTorch forward (unfolded value path, exact
    # softmax).  Inputs and the MQ/MK score operands go through the same bf16
    # rounding as the kernel (TPU has no f64); everything else stays f32, so the
    # kernel's algebraic V-fold and fused gather are still checked.
    def _bf16(x):
        return x.astype(jnp.bfloat16).astype(jnp.float32)

    embeds = jnp.take(_bf16(params["embeddings"]), batch_word_idxs, axis=0)
    mq = _bf16(embeds @ _bf16(params["w_q"]))
    mk = _bf16(embeds @ _bf16(params["w_k"]))
    mv = embeds @ params["w_v"]
    scores = jnp.einsum("bsm,btm->bst", mq, mk) / SQRT_M
    sf = jax.nn.softmax(scores, axis=-1)
    hidden = jnp.mean(jnp.einsum("bst,btm->bsm", sf, mv), axis=1)       # (B, M)
    hiddens = hidden @ params["mat"]                                    # (B, E)
    return hiddens @ params["weights"]                                  # (B, 1)


if __name__ == "__main__":
    corpus_size = 50
    B, S = 2, 8
    params = make_params(corpus_size)

    key = jax.random.PRNGKey(0)
    batch_word_idxs = jax.random.randint(key, (B, S), 0, corpus_size,
                                         dtype=jnp.int32)

    out = binary_classifier_forward(batch_word_idxs, params)
    out = jax.block_until_ready(out)

    ref = reference_forward(batch_word_idxs, params)
    assert out.shape == (B, 1)
    np.testing.assert_allclose(np.asarray(out), np.asarray(ref),
                               rtol=2e-2, atol=1.0)
    print("KERNEL_OK")
</pallas_src>

<mosaic_0001>
module attributes {stable_mosaic.version = 11 : i64} {
  func.func @_gather_attn_kernel(%arg0: i32, %arg1: memref<64x1xi32, #tpu.memory_space<vmem>>, %arg2: memref<128x128xbf16, #tpu.memory_space<vmem>>, %arg3: memref<128x256xbf16, #tpu.memory_space<vmem>>, %arg4: memref<1x128xf32, #tpu.memory_space<vmem>>, %arg5: memref<1x1x8xf32, #tpu.memory_space<vmem>>) attributes {dimension_semantics = [#tpu.dimension_semantics<parallel>], iteration_bounds = array<i64: 1>, scalar_prefetch = 0 : i64, scratch_operands = 0 : i64, tpu.core_type = #tpu.core_type<tc>, window_params = [{transform_indices = @transform_0, window_bounds = array<i64: 64, 1>}, {pipeline_mode = #tpu.pipeline_mode<synchronous>, transform_indices = @transform_1, window_bounds = array<i64: 128, 128>}, {pipeline_mode = #tpu.pipeline_mode<synchronous>, transform_indices = @transform_2, window_bounds = array<i64: 128, 256>}, {pipeline_mode = #tpu.pipeline_mode<synchronous>, transform_indices = @transform_3, window_bounds = array<i64: 1, 128>}, {transform_indices = @transform_4, window_bounds = array<i64: 1, 1, 8>}]} {
    %0 = tpu.iota {dimensions = array<i32: 1>} : vector<64x128xi32>
    %c0 = arith.constant 0 : index
    %c0_0 = arith.constant 0 : index
    %1 = vector.load %arg1[%c0, %c0_0] : memref<64x1xi32, #tpu.memory_space<vmem>>, vector<64x1xi32>
    %2 = vector.broadcast %1 : vector<64x1xi32> to vector<64x128xi32>
    %3 = arith.cmpi eq, %2, %0 : vector<64x128xi32>
    %4 = arith.extui %3 : vector<64x128xi1> to vector<64x128xi32>
    %5 = arith.sitofp %4 : vector<64x128xi32> to vector<64x128xf32>
    %6 = arith.truncf %5 : vector<64x128xf32> to vector<64x128xbf16>
    %c0_1 = arith.constant 0 : index
    %c0_2 = arith.constant 0 : index
    %7 = vector.load %arg2[%c0_1, %c0_2] : memref<128x128xbf16, #tpu.memory_space<vmem>>, vector<128x128xbf16>
    %cst = arith.constant dense<0.000000e+00> : vector<64x128xf32>
    %8 = tpu.matmul %6, %7, %cst {dimension_numbers = #tpu.dot_dimension_numbers<[1], [0], [0], [1], [0, 0, 1, 1], [], []>} : vector<64x128xbf16>, vector<128x128xbf16>, vector<64x128xf32> -> vector<64x128xf32>
    %9 = arith.truncf %8 : vector<64x128xf32> to vector<64x128xbf16>
    %c0_3 = arith.constant 0 : index
    %c0_4 = arith.constant 0 : index
    %10 = vector.load %arg3[%c0_3, %c0_4] : memref<128x256xbf16, #tpu.memory_space<vmem>>, vector<128x256xbf16>
    %c0_5 = arith.constant 0 : index
    %c0_6 = arith.constant 0 : index
    %11 = vector.load %arg4[%c0_5, %c0_6] : memref<1x128xf32, #tpu.memory_space<vmem>>, vector<1x128xf32>
    %cst_7 = arith.constant dense<0.000000e+00> : vector<64x256xf32>
    %12 = tpu.matmul %9, %10, %cst_7 {dimension_numbers = #tpu.dot_dimension_numbers<[1], [0], [0], [1], [0, 0, 1, 1], [], []>} : vector<64x128xbf16>, vector<128x256xbf16>, vector<64x256xf32> -> vector<64x256xf32>
    %13 = vector.extract_strided_slice %12 {offsets = [0, 0], sizes = [64, 128], strides = [1, 1]} : vector<64x256xf32> to vector<64x128xf32>
    %14 = arith.truncf %13 : vector<64x128xf32> to vector<64x128xbf16>
    %15 = vector.shape_cast %14 : vector<64x128xbf16> to vector<8x8x128xbf16>
    %16 = vector.extract_strided_slice %12 {offsets = [0, 128], sizes = [64, 128], strides = [1, 1]} : vector<64x256xf32> to vector<64x128xf32>
    %17 = arith.truncf %16 : vector<64x128xf32> to vector<64x128xbf16>
    %18 = vector.shape_cast %17 : vector<64x128xbf16> to vector<8x8x128xbf16>
    "tpu.trace_start"() <{level = 10 : i32, message = "btm,bsm->bts"}> : () -> ()
    %cst_8 = arith.constant dense<0.000000e+00> : vector<8x8x8xf32>
    %19 = tpu.matmul %18, %15, %cst_8 {dimension_numbers = #tpu.dot_dimension_numbers<[2], [2], [1], [1], [0, 0, 0, 1, 1, 1], [0], [0]>} : vector<8x8x128xbf16>, vector<8x8x128xbf16>, vector<8x8x8xf32> -> vector<8x8x8xf32>
    "tpu.trace_stop"() : () -> ()
    %cst_9 = arith.constant 1.250000e-01 : f32
    %20 = vector.broadcast %cst_9 : f32 to vector<8x8x8xf32>
    %21 = arith.mulf %19, %20 : vector<8x8x8xf32>
    %cst_10 = arith.constant dense<0xFF800000> : vector<8x8xf32>
    %22 = vector.multi_reduction <maximumf>, %21, %cst_10 [1] : vector<8x8x8xf32> to vector<8x8xf32>
    %23 = vector.shape_cast %22 : vector<8x8xf32> to vector<8x1x8xf32>
    %24 = vector.broadcast %23 : vector<8x1x8xf32> to vector<8x8x8xf32>
    %25 = arith.subf %21, %24 : vector<8x8x8xf32>
    %26 = math.exp %25 : vector<8x8x8xf32>
    %cst_11 = arith.constant dense<0.000000e+00> : vector<8x8xf32>
    %27 = vector.multi_reduction <add>, %26, %cst_11 [1] : vector<8x8x8xf32> to vector<8x8xf32>
    %28 = vector.shape_cast %27 : vector<8x8xf32> to vector<8x1x8xf32>
    %29 = tpu.reciprocal %28 {approx = true} : vector<8x1x8xf32> -> vector<8x1x8xf32>
    %30 = vector.broadcast %29 : vector<8x1x8xf32> to vector<8x8x8xf32>
    %31 = arith.mulf %26, %30 : vector<8x8x8xf32>
    %cst_12 = arith.constant dense<0.000000e+00> : vector<8x8xf32>
    %32 = vector.multi_reduction <add>, %31, %cst_12 [2] : vector<8x8x8xf32> to vector<8x8xf32>
    %33 = vector.shape_cast %32 : vector<8x8xf32> to vector<8x8x1xf32>
    %34 = vector.shape_cast %9 : vector<64x128xbf16> to vector<8x8x128xbf16>
    %35 = arith.extf %34 : vector<8x8x128xbf16> to vector<8x8x128xf32>
    %36 = vector.broadcast %33 : vector<8x8x1xf32> to vector<8x8x128xf32>
    %37 = arith.mulf %35, %36 : vector<8x8x128xf32>
    %cst_13 = arith.constant dense<0.000000e+00> : vector<8x128xf32>
    %38 = vector.multi_reduction <add>, %37, %cst_13 [1] : vector<8x8x128xf32> to vector<8x128xf32>
    "tpu.trace_start"() <{level = 10 : i32, message = "oe,be->ob"}> : () -> ()
    %cst_14 = arith.constant dense<0.000000e+00> : vector<1x8xf32>
    %39 = tpu.matmul %11, %38, %cst_14 {dimension_numbers = #tpu.dot_dimension_numbers<[1], [1], [0], [0], [0, 0, 1, 0], [], []>} : vector<1x128xf32>, vector<8x128xf32>, vector<1x8xf32> -> vector<1x8xf32>
    "tpu.trace_stop"() : () -> ()
    %cst_15 = arith.constant 1.250000e-01 : f32
    %40 = vector.broadcast %cst_15 : f32 to vector<1x8xf32>
    %41 = arith.mulf %39, %40 : vector<1x8xf32>
    %42 = vector.shape_cast %41 : vector<1x8xf32> to vector<1x1x8xf32>
    %c0_16 = arith.constant 0 : index
    %c0_17 = arith.constant 0 : index
    %c0_18 = arith.constant 0 : index
    %43 = vector.load %arg5[%c0_16, %c0_17, %c0_18] : memref<1x1x8xf32, #tpu.memory_space<vmem>>, vector<1x1x8xf32>
    tpu.vector_store %arg5[%c0_16, %c0_17, %c0_18], %42 {strides = array<i32>} : memref<1x1x8xf32, #tpu.memory_space<vmem>>, vector<1x1x8xf32>,
    return
  }
  func.func @transform_0(%arg0: i32) -> (i32, i32) {
    %c0_i32 = arith.constant 0 : i32
    %c0_i32_0 = arith.constant 0 : i32
    return %arg0, %c0_i32 : i32, i32
  }
  func.func @transform_1(%arg0: i32) -> (i32, i32) {
    %c0_i32 = arith.constant 0 : i32
    %c0_i32_0 = arith.constant 0 : i32
    %c0_i32_1 = arith.constant 0 : i32
    return %c0_i32, %c0_i32_0 : i32, i32
  }
  func.func @transform_2(%arg0: i32) -> (i32, i32) {
    %c0_i32 = arith.constant 0 : i32
    %c0_i32_0 = arith.constant 0 : i32
    %c0_i32_1 = arith.constant 0 : i32
    return %c0_i32, %c0_i32_0 : i32, i32
  }
  func.func @transform_3(%arg0: i32) -> (i32, i32) {
    %c0_i32 = arith.constant 0 : i32
    %c0_i32_0 = arith.constant 0 : i32
    %c0_i32_1 = arith.constant 0 : i32
    return %c0_i32, %c0_i32_0 : i32, i32
  }
  func.func @transform_4(%arg0: i32) -> (i32, i32, i32) {
    %c0_i32 = arith.constant 0 : i32
    %c0_i32_0 = arith.constant 0 : i32
    %c0_i32_1 = arith.constant 0 : i32
    return %arg0, %c0_i32, %c0_i32_0 : i32, i32, i32
  }
}

</mosaic_0001>

<llo_original>
// kernel: tpu_custom_call.1
$region0: #{tpu_custom_call.1}
  #allocation0 [shape = 'u32[]', space=smem, size = 0x4, offset = 0x4, fixed_abs, tag = 'smem constant byte address 0x4 - core index']
  #allocation1 [shape = 'u32[72,128]{1,0:T(1,128)}', space=vmem, size = 0x9000, scoped, tag = 'internal scratch']
  %s0 = inlined_call_operand.vmem [shape: s32[64,1], index: 0, kind: input, shape index: {}]
  %s1 = inlined_call_operand.vmem [shape: bf16[128,128], index: 1, kind: input, shape index: {}]
  %s2 = inlined_call_operand.hbm [shape: bf16[128,256], index: 2, kind: input, shape index: {}]
  %s3 = inlined_call_operand.vmem [shape: f32[1,128], index: 3, kind: input, shape index: {}]
  %s4 = inlined_call_operand.hbm [shape: f32[1,1,8], index: 4, kind: output, shape index: {}]
  %s5 = sld [smem:[#allocation0]]
  $region30: #{tpu_custom_call.1} parent=0
    _
  %s7 = ssub.s32 1, %s5
  %s8 = scalar_select 0, %s7, %s5
  $region1: #{tpu_custom_call.1} parent=0
    #allocation2 [shape = 'u8[65536]{0}', space=vmem, size = 0x10000, scoped, tag = 'input window, operand 2, single buffered']
    #allocation3 [shape = 's32[1]{0}', space=sflag, size = 0x4, scoped, tag = 'scoped memory for tpu_custom_call.1']
    #allocation4 [shape = 's32[1]{0}', space=sflag, size = 0x4, scoped, tag = 'scoped memory for tpu_custom_call.1']
    #allocation5 [shape = 'u8[512]{0}', space=vmem, size = 0x400, scoped, tag = 'output window, operand 0, single buffered']
    %9 = vsyncpa [#allocation3], 0
    %10 = vsyncpa [#allocation4], 0
    // Predicated region
    $region2: #{tpu_custom_call.1} parent=1 // pred_check
      _
    $region3: #{tpu_custom_call.1} parent=1 // pred_check_branch
      %12 = sbr.rel (0) target = $region5
    $region4: #{tpu_custom_call.1} parent=1 // pred_region
      _
    $region5: #{tpu_custom_call.1} parent=1 // pred_fallthru
      _
    // Predicated region
    $region6: #{tpu_custom_call.1} parent=1 // pred_check
      _
    $region7: #{tpu_custom_call.1} parent=1 // pred_check_branch
      %14 = sbr.rel (0) target = $region9
    $region8: #{tpu_custom_call.1} parent=1 // pred_region
      _
    $region9: #{tpu_custom_call.1} parent=1 // pred_fallthru
      _
    // Predicated region
    $region10: #{tpu_custom_call.1} parent=1 // pred_check
      _
    $region11: #{tpu_custom_call.1} parent=1 // pred_check_branch
      %16 = sbr.rel (0) target = $region13
    $region12: #{tpu_custom_call.1} parent=1 // pred_region
      %18 = vsyncadd [#allocation3], 0
      %s19 = sshll.u32 %s2, 4
      %s20 = int_to_ptr.hbm [resolvable:$true] %s19
      %s21 = sshll.u32 [#allocation2], 4
      %s22 = int_to_ptr.vmem [resolvable:$true] %s21
      %27 = dma.hbm_to_vmem [thread:$0]  %s20, 2048, %s22, [#allocation3], 128, 128, 8
    $region13: #{tpu_custom_call.1} parent=1 // pred_fallthru
      _
    // Predicated region
    $region14: #{tpu_custom_call.1} parent=1 // pred_check
      _
    $region15: #{tpu_custom_call.1} parent=1 // pred_check_branch
      %29 = sbr.rel (0) target = $region17
    $region16: #{tpu_custom_call.1} parent=1 // pred_region
      _
    $region17: #{tpu_custom_call.1} parent=1 // pred_fallthru
      _
    // Predicated region
    $region18: #{tpu_custom_call.1} parent=1 // pred_check
      _
    $region19: #{tpu_custom_call.1} parent=1 // pred_check_branch
      %31 = sbr.rel (0) target = $region21
    $region20: #{tpu_custom_call.1} parent=1 // pred_region
      %33 = dma.done [#allocation3], 2048
    $region21: #{tpu_custom_call.1} parent=1 // pred_fallthru
      _
    %v35 = vlaneseq
    %v36 = vand.u32 %v35, 127
    %v37 = vld [vmem:[%s0] sm:$0xff]
    %v38 = vld [vmem:[%s0 + $0x8] sm:$0xff]
    %v39 = vld [vmem:[%s0 + $0x10] sm:$0xff]
    %v40 = vld [vmem:[%s0 + $0x18] sm:$0xff]
    %v41 = vld [vmem:[%s0 + $0x20] sm:$0xff]
    %v42 = vld [vmem:[%s0 + $0x28] sm:$0xff]
    %v43 = vld [vmem:[%s0 + $0x30] sm:$0xff]
    %v44 = vld [vmem:[%s0 + $0x38] sm:$0xff]
    %45 = vset.pattern.permute.xlu0 0
    %46 = vperm.xlu0 %45, %v37
    %v47 = vpop.permute.xlu0 %46
    %48 = vset.pattern.permute.xlu0 0
    %49 = vperm.xlu0 %48, %v38
    %v50 = vpop.permute.xlu0 %49
    %51 = vset.pattern.permute.xlu0 0
    %52 = vperm.xlu0 %51, %v39
    %v53 = vpop.permute.xlu0 %52
    %54 = vset.pattern.permute.xlu0 0
    %55 = vperm.xlu0 %54, %v40
    %v56 = vpop.permute.xlu0 %55
    %57 = vset.pattern.permute.xlu0 0
    %58 = vperm.xlu0 %57, %v41
    %v59 = vpop.permute.xlu0 %58
    %60 = vset.pattern.permute.xlu0 0
    %61 = vperm.xlu0 %60, %v42
    %v62 = vpop.permute.xlu0 %61
    %63 = vset.pattern.permute.xlu0 0
    %64 = vperm.xlu0 %63, %v43
    %v65 = vpop.permute.xlu0 %64
    %66 = vset.pattern.permute.xlu0 0
    %67 = vperm.xlu0 %66, %v44
    %v68 = vpop.permute.xlu0 %67
    %vm69 = vcmp.eq.s32.totalorder %v47, %v36
    %vm70 = vcmp.eq.s32.totalorder %v50, %v36
    %vm71 = vcmp.eq.s32.totalorder %v53, %v36
    %vm72 = vcmp.eq.s32.totalorder %v56, %v36
    %vm73 = vcmp.eq.s32.totalorder %v59, %v36
    %vm74 = vcmp.eq.s32.totalorder %v62, %v36
    %vm75 = vcmp.eq.s32.totalorder %v65, %v36
    %vm76 = vcmp.eq.s32.totalorder %v68, %v36
    %v77 = vsel %vm69, 1, 0
    %v78 = vsel %vm70, 1, 0
    %v79 = vsel %vm71, 1, 0
    %v80 = vsel %vm72, 1, 0
    %v81 = vsel %vm73, 1, 0
    %v82 = vsel %vm74, 1, 0
    %v83 = vsel %vm75, 1, 0
    %v84 = vsel %vm76, 1, 0
    %v85 = vcvt.s32.f32 %v77
    %v86 = vcvt.s32.f32 %v78
    %v87 = vcvt.s32.f32 %v79
    %v88 = vcvt.s32.f32 %v80
    %v89 = vcvt.s32.f32 %v81
    %v90 = vcvt.s32.f32 %v82
    %v91 = vcvt.s32.f32 %v83
    %v92 = vcvt.s32.f32 %v84
    %v93 = vpack.c.bf16 %v86, %v85
    %v94 = vpack.c.bf16 %v88, %v87
    %v95 = vpack.c.bf16 %v90, %v89
    %v96 = vpack.c.bf16 %v92, %v91
    %v97 = vld [vmem:[%s1] sm:$0xf]
    %v98 = vld [vmem:[%s1 + $0x4] sm:$0xf]
    %v99 = vld [vmem:[%s1 + $0x8] sm:$0xf]
    %v100 = vld [vmem:[%s1 + $0xc] sm:$0xf]
    %v101 = vld [vmem:[%s1 + $0x10] sm:$0xf]
    %v102 = vld [vmem:[%s1 + $0x14] sm:$0xf]
    %v103 = vld [vmem:[%s1 + $0x18] sm:$0xf]
    %v104 = vld [vmem:[%s1 + $0x1c] sm:$0xf]
    %v105 = vld [vmem:[%s1 + $0x20] sm:$0xf]
    %v106 = vld [vmem:[%s1 + $0x24] sm:$0xf]
    %v107 = vld [vmem:[%s1 + $0x28] sm:$0xf]
    %v108 = vld [vmem:[%s1 + $0x2c] sm:$0xf]
    %v109 = vld [vmem:[%s1 + $0x30] sm:$0xf]
    %v110 = vld [vmem:[%s1 + $0x34] sm:$0xf]
    %v111 = vld [vmem:[%s1 + $0x38] sm:$0xf]
    %v112 = vld [vmem:[%s1 + $0x3c] sm:$0xf]
    %v129 = vunpack.c.l.b16 %v97
    %v130 = vunpack.c.l.b16 %v98
    %v131 = vunpack.c.l.b16 %v99
    %v132 = vunpack.c.l.b16 %v100
    %v133 = vunpack.c.l.b16 %v101
    %v134 = vunpack.c.l.b16 %v102
    %v135 = vunpack.c.l.b16 %v103
    %v136 = vunpack.c.l.b16 %v104
    %v137 = vunpack.c.l.b16 %v105
    %v138 = vunpack.c.l.b16 %v106
    %v139 = vunpack.c.l.b16 %v107
    %v140 = vunpack.c.l.b16 %v108
    %v141 = vunpack.c.l.b16 %v109
    %v142 = vunpack.c.l.b16 %v110
    %v143 = vunpack.c.l.b16 %v111
    %v144 = vunpack.c.l.b16 %v112
    %v145 = vpack.c.b16 %v130, %v129
    %v146 = vpack.c.b16 %v132, %v131
    %v147 = vpack.c.b16 %v134, %v133
    %v148 = vpack.c.b16 %v136, %v135
    %v149 = vpack.c.b16 %v138, %v137
    %v150 = vpack.c.b16 %v140, %v139
    %v151 = vpack.c.b16 %v142, %v141
    %v152 = vpack.c.b16 %v144, %v143
    %161 = vmatpush.bf16.msra.mxu0 %v152
    %162 = vmatpush.bf16.msra.mxu0 %v151
    %163 = vmatpush.bf16.msra.mxu0 %v150
    %164 = vmatpush.bf16.msra.mxu0 %v149
    %165 = vmatpush.bf16.msra.mxu0 %v148
    %166 = vmatpush.bf16.msra.mxu0 %v147
    %167 = vmatpush.bf16.msra.mxu0 %v146
    %168 = vmatpush.bf16.msra.mxu0 %v145
    %169 = vmatmul.bf16.gmra.mxu0 %v93
    %v170 = vpop.f32.mrf.mxu0
    %v171 = vadd.f32 0.0, %v170
    %v172 = vpop.f32.mrf.mxu0
    %v173 = vadd.f32 0.0, %v172
    %174 = vmatmul.bf16.gmra.mxu0 %v94
    %v175 = vpop.f32.mrf.mxu0
    %v176 = vadd.f32 0.0, %v175
    %v177 = vpop.f32.mrf.mxu0
    %v178 = vadd.f32 0.0, %v177
    %179 = vmatmul.bf16.gmra.mxu0 %v95
    %v180 = vpop.f32.mrf.mxu0
    %v181 = vadd.f32 0.0, %v180
    %v182 = vpop.f32.mrf.mxu0
    %v183 = vadd.f32 0.0, %v182
    %184 = vmatmul.bf16.gmra.mxu0 %v96
    %v185 = vpop.f32.mrf.mxu0
    %v186 = vadd.f32 0.0, %v185
    %v187 = vpop.f32.mrf.mxu0
    %v188 = vadd.f32 0.0, %v187
    %189 = vdwg.mxu0
    %v190 = vpack.c.bf16 %v171, %v171
    %v191 = vpack.c.bf16 %v173, %v173
    %v192 = vpack.c.bf16 %v176, %v176
    %v193 = vpack.c.bf16 %v178, %v178
    %v194 = vpack.c.bf16 %v181, %v181
    %v195 = vpack.c.bf16 %v183, %v183
    %v196 = vpack.c.bf16 %v186, %v186
    %v197 = vpack.c.bf16 %v188, %v188
    %v198 = vld [vmem:[#allocation2] sm:$0xff]
    %v199 = vld [vmem:[#allocation2 + $0x8] sm:$0xff]
    %v200 = vld [vmem:[#allocation2 + $0x10] sm:$0xff]
    %v201 = vld [vmem:[#allocation2 + $0x18] sm:$0xff]
    %v202 = vld [vmem:[#allocation2 + $0x20] sm:$0xff]
    %v203 = vld [vmem:[#allocation2 + $0x28] sm:$0xff]
    %v204 = vld [vmem:[#allocation2 + $0x30] sm:$0xff]
    %v205 = vld [vmem:[#allocation2 + $0x38] sm:$0xff]
    %v206 = vld [vmem:[#allocation2 + $0x40] sm:$0xff]
    %v207 = vld [vmem:[#allocation2 + $0x48] sm:$0xff]
    %v208 = vld [vmem:[#allocation2 + $0x50] sm:$0xff]
    %v209 = vld [vmem:[#allocation2 + $0x58] sm:$0xff]
    %v210 = vld [vmem:[#allocation2 + $0x60] sm:$0xff]
    %v211 = vld [vmem:[#allocation2 + $0x68] sm:$0xff]
    %v212 = vld [vmem:[#allocation2 + $0x70] sm:$0xff]
    %v213 = vld [vmem:[#allocation2 + $0x78] sm:$0xff]
    %v214 = vld [vmem:[%s3] sm:$0x1]
    %v223 = vunpack.c.l.b16 %v190
    %v224 = vunpack.c.l.b16 %v191
    %v225 = vunpack.c.l.b16 %v192
    %v226 = vunpack.c.l.b16 %v193
    %v227 = vunpack.c.l.b16 %v194
    %v228 = vunpack.c.l.b16 %v195
    %v229 = vunpack.c.l.b16 %v196
    %v230 = vunpack.c.l.b16 %v197
    %v231 = vpack.c.b16 %v224, %v223
    %v232 = vpack.c.b16 %v226, %v225
    %v233 = vpack.c.b16 %v228, %v227
    %v234 = vpack.c.b16 %v230, %v229
    %v255 = vunpack.c.l.b16 %v198
    %v256 = vunpack.c.h.b16 %v198
    %v257 = vunpack.c.l.b16 %v199
    %v258 = vunpack.c.h.b16 %v199
    %v259 = vunpack.c.l.b16 %v200
    %v260 = vunpack.c.h.b16 %v200
    %v261 = vunpack.c.l.b16 %v201
    %v262 = vunpack.c.h.b16 %v201
    %v263 = vunpack.c.l.b16 %v202
    %v264 = vunpack.c.h.b16 %v202
    %v265 = vunpack.c.l.b16 %v203
    %v266 = vunpack.c.h.b16 %v203
    %v267 = vunpack.c.l.b16 %v204
    %v268 = vunpack.c.h.b16 %v204
    %v269 = vunpack.c.l.b16 %v205
    %v270 = vunpack.c.h.b16 %v205
    %v271 = vunpack.c.l.b16 %v206
    %v272 = vunpack.c.h.b16 %v206
    %v273 = vunpack.c.l.b16 %v207
    %v274 = vunpack.c.h.b16 %v207
    %v275 = vunpack.c.l.b16 %v208
    %v276 = vunpack.c.h.b16 %v208
    %v277 = vunpack.c.l.b16 %v209
    %v278 = vunpack.c.h.b16 %v209
    %v279 = vunpack.c.l.b16 %v210
    %v280 = vunpack.c.h.b16 %v210
    %v281 = vunpack.c.l.b16 %v211
    %v282 = vunpack.c.h.b16 %v211
    %v283 = vunpack.c.l.b16 %v212
    %v284 = vunpack.c.h.b16 %v212
    %v285 = vunpack.c.l.b16 %v213
    %v286 = vunpack.c.h.b16 %v213
    %v287 = vpack.c.b16 %v257, %v255
    %v288 = vpack.c.b16 %v258, %v256
    %v289 = vpack.c.b16 %v261, %v259
    %v290 = vpack.c.b16 %v262, %v260
    %v291 = vpack.c.b16 %v265, %v263
    %v292 = vpack.c.b16 %v266, %v264
    %v293 = vpack.c.b16 %v269, %v267
    %v294 = vpack.c.b16 %v270, %v268
    %v295 = vpack.c.b16 %v273, %v271
    %v296 = vpack.c.b16 %v274, %v272
    %v297 = vpack.c.b16 %v277, %v275
    %v298 = vpack.c.b16 %v278, %v276
    %v299 = vpack.c.b16 %v281, %v279
    %v300 = vpack.c.b16 %v282, %v280
    %v301 = vpack.c.b16 %v285, %v283
    %v302 = vpack.c.b16 %v286, %v284
    %319 = vmatpush.bf16.msra.mxu0 %v301
    %320 = vmatpush.bf16.msra.mxu0 %v299
    %321 = vmatpush.bf16.msra.mxu0 %v297
    %322 = vmatpush.bf16.msra.mxu0 %v295
    %323 = vmatpush.bf16.msra.mxu0 %v293
    %324 = vmatpush.bf16.msra.mxu0 %v291
    %325 = vmatpush.bf16.msra.mxu0 %v289
    %326 = vmatpush.bf16.msra.mxu0 %v287
    %327 = vmatmul.bf16.gmra.mxu0 %v231
    %v328 = vpop.f32.mrf.mxu0
    %v329 = vadd.f32 0.0, %v328
    %v330 = vpop.f32.mrf.mxu0
    %v331 = vadd.f32 0.0, %v330
    %332 = vmatmul.bf16.gmra.mxu0 %v232
    %v333 = vpop.f32.mrf.mxu0
    %v334 = vadd.f32 0.0, %v333
    %v335 = vpop.f32.mrf.mxu0
    %v336 = vadd.f32 0.0, %v335
    %337 = vmatmul.bf16.gmra.mxu0 %v233
    %v338 = vpop.f32.mrf.mxu0
    %v339 = vadd.f32 0.0, %v338
    %v340 = vpop.f32.mrf.mxu0
    %v341 = vadd.f32 0.0, %v340
    %342 = vmatmul.bf16.gmra.mxu0 %v234
    %v343 = vpop.f32.mrf.mxu0
    %v344 = vadd.f32 0.0, %v343
    %v345 = vpop.f32.mrf.mxu0
    %v346 = vadd.f32 0.0, %v345
    %347 = vdwg.mxu0
    %348 = vmatpush.bf16.msra.mxu0 %v302
    %349 = vmatpush.bf16.msra.mxu0 %v300
    %350 = vmatpush.bf16.msra.mxu0 %v298
    %351 = vmatpush.bf16.msra.mxu0 %v296
    %352 = vmatpush.bf16.msra.mxu0 %v294
    %353 = vmatpush.bf16.msra.mxu0 %v292
    %354 = vmatpush.bf16.msra.mxu0 %v290
    %355 = vmatpush.bf16.msra.mxu0 %v288
    %356 = vmatmul.bf16.gmra.mxu0 %v231
    %v357 = vpop.f32.mrf.mxu0
    %v358 = vadd.f32 0.0, %v357
    %v359 = vpop.f32.mrf.mxu0
    %v360 = vadd.f32 0.0, %v359
    %361 = vmatmul.bf16.gmra.mxu0 %v232
    %v362 = vpop.f32.mrf.mxu0
    %v363 = vadd.f32 0.0, %v362
    %v364 = vpop.f32.mrf.mxu0
    %v365 = vadd.f32 0.0, %v364
    %366 = vmatmul.bf16.gmra.mxu0 %v233
    %v367 = vpop.f32.mrf.mxu0
    %v368 = vadd.f32 0.0, %v367
    %v369 = vpop.f32.mrf.mxu0
    %v370 = vadd.f32 0.0, %v369
    %371 = vmatmul.bf16.gmra.mxu0 %v234
    %v372 = vpop.f32.mrf.mxu0
    %v373 = vadd.f32 0.0, %v372
    %v374 = vpop.f32.mrf.mxu0
    %v375 = vadd.f32 0.0, %v374
    %376 = vdwg.mxu0
    %v377 = vpack.c.bf16 %v329, %v329
    %v378 = vpack.c.bf16 %v331, %v331
    %v379 = vpack.c.bf16 %v334, %v334
    %v380 = vpack.c.bf16 %v336, %v336
    %v381 = vpack.c.bf16 %v339, %v339
    %v382 = vpack.c.bf16 %v341, %v341
    %v383 = vpack.c.bf16 %v344, %v344
    %v384 = vpack.c.bf16 %v346, %v346
    %v385 = vpack.c.bf16 %v358, %v358
    %v386 = vpack.c.bf16 %v360, %v360
    %v387 = vpack.c.bf16 %v363, %v363
    %v388 = vpack.c.bf16 %v365, %v365
    %v389 = vpack.c.bf16 %v368, %v368
    %v390 = vpack.c.bf16 %v370, %v370
    %v391 = vpack.c.bf16 %v373, %v373
    %v392 = vpack.c.bf16 %v375, %v375
    %393 = vmatpush.bf16.xpose.msra.mxu0 0
    %394 = vmatpush.bf16.xpose.msra.mxu0 0
    %395 = vmatpush.bf16.xpose.msra.mxu0 0
    %396 = vmatpush.bf16.xpose.msra.mxu0 0
    %397 = vmatpush.bf16.xpose.msra.mxu0 0
    %398 = vmatpush.bf16.xpose.msra.mxu0 0
    %399 = vmatpush.bf16.xpose.msra.mxu0 0
    %400 = vmatpush.bf16.xpose.msra.mxu0 %v377
    %401 = vmatmul.bf16.gmra.mxu0 %v385
    %v402 = vpop.f32.mrf.mxu0
    %v403 = vadd.f32 0.0, %v402
    %v404 = vpop.f32.mrf.mxu0
    %405 = vdwg.mxu0
    %406 = vmatpush.bf16.xpose.msra.mxu0 0
    %407 = vmatpush.bf16.xpose.msra.mxu0 0
    %408 = vmatpush.bf16.xpose.msra.mxu0 0
    %409 = vmatpush.bf16.xpose.msra.mxu0 0
    %410 = vmatpush.bf16.xpose.msra.mxu0 0
    %411 = vmatpush.bf16.xpose.msra.mxu0 0
    %412 = vmatpush.bf16.xpose.msra.mxu0 0
    %413 = vmatpush.bf16.xpose.msra.mxu0 %v378
    %414 = vmatmul.bf16.gmra.mxu0 %v386
    %v415 = vpop.f32.mrf.mxu0
    %v416 = vadd.f32 0.0, %v415
    %v417 = vpop.f32.mrf.mxu0
    %418 = vdwg.mxu0
    %419 = vmatpush.bf16.xpose.msra.mxu0 0
    %420 = vmatpush.bf16.xpose.msra.mxu0 0
    %421 = vmatpush.bf16.xpose.msra.mxu0 0
    %422 = vmatpush.bf16.xpose.msra.mxu0 0
    %423 = vmatpush.bf16.xpose.msra.mxu0 0
    %424 = vmatpush.bf16.xpose.msra.mxu0 0
    %425 = vmatpush.bf16.xpose.msra.mxu0 0
    %426 = vmatpush.bf16.xpose.msra.mxu0 %v379
    %427 = vmatmul.bf16.gmra.mxu0 %v387
    %v428 = vpop.f32.mrf.mxu0
    %v429 = vadd.f32 0.0, %v428
    %v430 = vpop.f32.mrf.mxu0
    %431 = vdwg.mxu0
    %432 = vmatpush.bf16.xpose.msra.mxu0 0
    %433 = vmatpush.bf16.xpose.msra.mxu0 0
    %434 = vmatpush.bf16.xpose.msra.mxu0 0
    %435 = vmatpush.bf16.xpose.msra.mxu0 0
    %436 = vmatpush.bf16.xpose.msra.mxu0 0
    %437 = vmatpush.bf16.xpose.msra.mxu0 0
    %438 = vmatpush.bf16.xpose.msra.mxu0 0
    %439 = vmatpush.bf16.xpose.msra.mxu0 %v380
    %440 = vmatmul.bf16.gmra.mxu0 %v388
    %v441 = vpop.f32.mrf.mxu0
    %v442 = vadd.f32 0.0, %v441
    %v443 = vpop.f32.mrf.mxu0
    %444 = vdwg.mxu0
    %445 = vmatpush.bf16.xpose.msra.mxu0 0
    %446 = vmatpush.bf16.xpose.msra.mxu0 0
    %447 = vmatpush.bf16.xpose.msra.mxu0 0
    %448 = vmatpush.bf16.xpose.msra.mxu0 0
    %449 = vmatpush.bf16.xpose.msra.mxu0 0
    %450 = vmatpush.bf16.xpose.msra.mxu0 0
    %451 = vmatpush.bf16.xpose.msra.mxu0 0
    %452 = vmatpush.bf16.xpose.msra.mxu0 %v381
    %453 = vmatmul.bf16.gmra.mxu0 %v389
    %v454 = vpop.f32.mrf.mxu0
    %v455 = vadd.f32 0.0, %v454
    %v456 = vpop.f32.mrf.mxu0
    %457 = vdwg.mxu0
    %458 = vmatpush.bf16.xpose.msra.mxu0 0
    %459 = vmatpush.bf16.xpose.msra.mxu0 0
    %460 = vmatpush.bf16.xpose.msra.mxu0 0
    %461 = vmatpush.bf16.xpose.msra.mxu0 0
    %462 = vmatpush.bf16.xpose.msra.mxu0 0
    %463 = vmatpush.bf16.xpose.msra.mxu0 0
    %464 = vmatpush.bf16.xpose.msra.mxu0 0
    %465 = vmatpush.bf16.xpose.msra.mxu0 %v382
    %466 = vmatmul.bf16.gmra.mxu0 %v390
    %v467 = vpop.f32.mrf.mxu0
    %v468 = vadd.f32 0.0, %v467
    %v469 = vpop.f32.mrf.mxu0
    %470 = vdwg.mxu0
    %471 = vmatpush.bf16.xpose.msra.mxu0 0
    %472 = vmatpush.bf16.xpose.msra.mxu0 0
    %473 = vmatpush.bf16.xpose.msra.mxu0 0
    %474 = vmatpush.bf16.xpose.msra.mxu0 0
    %475 = vmatpush.bf16.xpose.msra.mxu0 0
    %476 = vmatpush.bf16.xpose.msra.mxu0 0
    %477 = vmatpush.bf16.xpose.msra.mxu0 0
    %478 = vmatpush.bf16.xpose.msra.mxu0 %v383
    %479 = vmatmul.bf16.gmra.mxu0 %v391
    %v480 = vpop.f32.mrf.mxu0
    %v481 = vadd.f32 0.0, %v480
    %v482 = vpop.f32.mrf.mxu0
    %483 = vdwg.mxu0
    %484 = vmatpush.bf16.xpose.msra.mxu0 0
    %485 = vmatpush.bf16.xpose.msra.mxu0 0
    %486 = vmatpush.bf16.xpose.msra.mxu0 0
    %487 = vmatpush.bf16.xpose.msra.mxu0 0
    %488 = vmatpush.bf16.xpose.msra.mxu0 0
    %489 = vmatpush.bf16.xpose.msra.mxu0 0
    %490 = vmatpush.bf16.xpose.msra.mxu0 0
    %491 = vmatpush.bf16.xpose.msra.mxu0 %v384
    %492 = vmatmul.bf16.gmra.mxu0 %v392
    %v493 = vpop.f32.mrf.mxu0
    %v494 = vadd.f32 0.0, %v493
    %v495 = vpop.f32.mrf.mxu0
    %496 = vdwg.mxu0
    %v497 = vmul.f32 %v403, 0.125
    %v498 = vmul.f32 %v416, 0.125
    %v499 = vmul.f32 %v429, 0.125
    %v500 = vmul.f32 %v442, 0.125
    %v501 = vmul.f32 %v455, 0.125
    %v502 = vmul.f32 %v468, 0.125
    %v503 = vmul.f32 %v481, 0.125
    %v504 = vmul.f32 %v494, 0.125
    %vm505 = vcmask 64512
    %v506 = vsel %vm505, %v497, -inf
    %v507 = vrot.slane %v506, 4
    %v508 = vmax.f32 %v506, %v507
    %v509 = vrot.slane %v508, 2
    %v510 = vmax.f32 %v508, %v509
    %v511 = vrot.slane %v510, 1
    %v512 = vmax.f32 %v510, %v511
    %v513 = vsel %vm505, %v498, -inf
    %v514 = vrot.slane %v513, 4
    %v515 = vmax.f32 %v513, %v514
    %v516 = vrot.slane %v515, 2
    %v517 = vmax.f32 %v515, %v516
    %v518 = vrot.slane %v517, 1
    %v519 = vmax.f32 %v517, %v518
    %v520 = vsel %vm505, %v499, -inf
    %v521 = vrot.slane %v520, 4
    %v522 = vmax.f32 %v520, %v521
    %v523 = vrot.slane %v522, 2
    %v524 = vmax.f32 %v522, %v523
    %v525 = vrot.slane %v524, 1
    %v526 = vmax.f32 %v524, %v525
    %v527 = vsel %vm505, %v500, -inf
    %v528 = vrot.slane %v527, 4
    %v529 = vmax.f32 %v527, %v528
    %v530 = vrot.slane %v529, 2
    %v531 = vmax.f32 %v529, %v530
    %v532 = vrot.slane %v531, 1
    %v533 = vmax.f32 %v531, %v532
    %v534 = vsel %vm505, %v501, -inf
    %v535 = vrot.slane %v534, 4
    %v536 = vmax.f32 %v534, %v535
    %v537 = vrot.slane %v536, 2
    %v538 = vmax.f32 %v536, %v537
    %v539 = vrot.slane %v538, 1
    %v540 = vmax.f32 %v538, %v539
    %v541 = vsel %vm505, %v502, -inf
    %v542 = vrot.slane %v541, 4
    %v543 = vmax.f32 %v541, %v542
    %v544 = vrot.slane %v543, 2
    %v545 = vmax.f32 %v543, %v544
    %v546 = vrot.slane %v545, 1
    %v547 = vmax.f32 %v545, %v546
    %v548 = vsel %vm505, %v503, -inf
    %v549 = vrot.slane %v548, 4
    %v550 = vmax.f32 %v548, %v549
    %v551 = vrot.slane %v550, 2
    %v552 = vmax.f32 %v550, %v551
    %v553 = vrot.slane %v552, 1
    %v554 = vmax.f32 %v552, %v553
    %v555 = vsel %vm505, %v504, -inf
    %v556 = vrot.slane %v555, 4
    %v557 = vmax.f32 %v555, %v556
    %v558 = vrot.slane %v557, 2
    %v559 = vmax.f32 %v557, %v558
    %v560 = vrot.slane %v559, 1
    %v561 = vmax.f32 %v559, %v560
    %v562 = vsub.f32 %v497, %v512
    %v563 = vsub.f32 %v498, %v519
    %v564 = vsub.f32 %v499, %v526
    %v565 = vsub.f32 %v500, %v533
    %v566 = vsub.f32 %v501, %v540
    %v567 = vsub.f32 %v502, %v547
    %v568 = vsub.f32 %v503, %v554
    %v569 = vsub.f32 %v504, %v561
    %v570 = vmul.f32 %v562, 1.442695
    %v571 = vpow.pop %v570
    %v572 = vmul.f32 %v563, 1.442695
    %v573 = vpow.pop %v572
    %v574 = vmul.f32 %v564, 1.442695
    %v575 = vpow.pop %v574
    %v576 = vmul.f32 %v565, 1.442695
    %v577 = vpow.pop %v576
    %v578 = vmul.f32 %v566, 1.442695
    %v579 = vpow.pop %v578
    %v580 = vmul.f32 %v567, 1.442695
    %v581 = vpow.pop %v580
    %v582 = vmul.f32 %v568, 1.442695
    %v583 = vpow.pop %v582
    %v584 = vmul.f32 %v569, 1.442695
    %v585 = vpow.pop %v584
    %v586 = vsel %vm505, %v571, 0.0
    %v587 = vrot.slane %v586, 4
    %v588 = vadd.f32 %v586, %v587
    %v589 = vrot.slane %v588, 2
    %v590 = vadd.f32 %v588, %v589
    %v591 = vrot.slane %v590, 1
    %v592 = vadd.f32 %v590, %v591
    %v593 = vsel %vm505, %v573, 0.0
    %v594 = vrot.slane %v593, 4
    %v595 = vadd.f32 %v593, %v594
    %v596 = vrot.slane %v595, 2
    %v597 = vadd.f32 %v595, %v596
    %v598 = vrot.slane %v597, 1
    %v599 = vadd.f32 %v597, %v598
    %v600 = vsel %vm505, %v575, 0.0
    %v601 = vrot.slane %v600, 4
    %v602 = vadd.f32 %v600, %v601
    %v603 = vrot.slane %v602, 2
    %v604 = vadd.f32 %v602, %v603
    %v605 = vrot.slane %v604, 1
    %v606 = vadd.f32 %v604, %v605
    %v607 = vsel %vm505, %v577, 0.0
    %v608 = vrot.slane %v607, 4
    %v609 = vadd.f32 %v607, %v608
    %v610 = vrot.slane %v609, 2
    %v611 = vadd.f32 %v609, %v610
    %v612 = vrot.slane %v611, 1
    %v613 = vadd.f32 %v611, %v612
    %v614 = vsel %vm505, %v579, 0.0
    %v615 = vrot.slane %v614, 4
    %v616 = vadd.f32 %v614, %v615
    %v617 = vrot.slane %v616, 2
    %v618 = vadd.f32 %v616, %v617
    %v619 = vrot.slane %v618, 1
    %v620 = vadd.f32 %v618, %v619
    %v621 = vsel %vm505, %v581, 0.0
    %v622 = vrot.slane %v621, 4
    %v623 = vadd.f32 %v621, %v622
    %v624 = vrot.slane %v623, 2
    %v625 = vadd.f32 %v623, %v624
    %v626 = vrot.slane %v625, 1
    %v627 = vadd.f32 %v625, %v626
    %v628 = vsel %vm505, %v583, 0.0
    %v629 = vrot.slane %v628, 4
    %v630 = vadd.f32 %v628, %v629
    %v631 = vrot.slane %v630, 2
    %v632 = vadd.f32 %v630, %v631
    %v633 = vrot.slane %v632, 1
    %v634 = vadd.f32 %v632, %v633
    %v635 = vsel %vm505, %v585, 0.0
    %v636 = vrot.slane %v635, 4
    %v637 = vadd.f32 %v635, %v636
    %v638 = vrot.slane %v637, 2
    %v639 = vadd.f32 %v637, %v638
    %v640 = vrot.slane %v639, 1
    %v641 = vadd.f32 %v639, %v640
    %v642 = vrcp.pop %v592
    %v643 = vrcp.pop %v599
    %v644 = vrcp.pop %v606
    %v645 = vrcp.pop %v613
    %v646 = vrcp.pop %v620
    %v647 = vrcp.pop %v627
    %v648 = vrcp.pop %v634
    %v649 = vrcp.pop %v641
    %v650 = vmul.f32 %v571, %v642
    %v651 = vmul.f32 %v573, %v643
    %v652 = vmul.f32 %v575, %v644
    %v653 = vmul.f32 %v577, %v645
    %v654 = vmul.f32 %v579, %v646
    %v655 = vmul.f32 %v581, %v647
    %v656 = vmul.f32 %v583, %v648
    %v657 = vmul.f32 %v585, %v649
    %v658 = vsel %vm505, %v650, 0.0
    %659 = vadd.xlane.f32.xlu0 %v658
    %v660 = vpop.xlane.xlu0 %659
    %v661 = vsel %vm505, %v651, 0.0
    %662 = vadd.xlane.f32.xlu0 %v661
    %v663 = vpop.xlane.xlu0 %662
    %v664 = vsel %vm505, %v652, 0.0
    %665 = vadd.xlane.f32.xlu0 %v664
    %v666 = vpop.xlane.xlu0 %665
    %v667 = vsel %vm505, %v653, 0.0
    %668 = vadd.xlane.f32.xlu0 %v667
    %v669 = vpop.xlane.xlu0 %668
    %v670 = vsel %vm505, %v654, 0.0
    %671 = vadd.xlane.f32.xlu0 %v670
    %v672 = vpop.xlane.xlu0 %671
    %v673 = vsel %vm505, %v655, 0.0
    %674 = vadd.xlane.f32.xlu0 %v673
    %v675 = vpop.xlane.xlu0 %674
    %v676 = vsel %vm505, %v656, 0.0
    %677 = vadd.xlane.f32.xlu0 %v676
    %v678 = vpop.xlane.xlu0 %677
    %v679 = vsel %vm505, %v657, 0.0
    %680 = vadd.xlane.f32.xlu0 %v679
    %v681 = vpop.xlane.xlu0 %680
    %v682 = vunpack.c.l.bf16 %v190
    %v683 = vunpack.c.l.bf16 %v191
    %v684 = vunpack.c.l.bf16 %v192
    %v685 = vunpack.c.l.bf16 %v193
    %v686 = vunpack.c.l.bf16 %v194
    %v687 = vunpack.c.l.bf16 %v195
    %v688 = vunpack.c.l.bf16 %v196
    %v689 = vunpack.c.l.bf16 %v197
    %v690 = vmul.f32 %v682, %v660
    %v691 = vmul.f32 %v683, %v663
    %v692 = vmul.f32 %v684, %v666
    %v693 = vmul.f32 %v685, %v669
    %v694 = vmul.f32 %v686, %v672
    %v695 = vmul.f32 %v687, %v675
    %v696 = vmul.f32 %v688, %v678
    %v697 = vmul.f32 %v689, %v681
    %v698 = vrot.slane %v690, 4
    %v699 = vadd.f32 %v690, %v698
    %v700 = vrot.slane %v699, 2
    %v701 = vadd.f32 %v699, %v700
    %v702 = vrot.slane %v701, 1
    %v703 = vadd.f32 %v701, %v702
    %v704 = vrot.slane %v691, 4
    %v705 = vadd.f32 %v691, %v704
    %v706 = vrot.slane %v705, 2
    %v707 = vadd.f32 %v705, %v706
    %v708 = vrot.slane %v707, 1
    %v709 = vadd.f32 %v707, %v708
    %v710 = vrot.slane %v692, 4
    %v711 = vadd.f32 %v692, %v710
    %v712 = vrot.slane %v711, 2
    %v713 = vadd.f32 %v711, %v712
    %v714 = vrot.slane %v713, 1
    %v715 = vadd.f32 %v713, %v714
    %v716 = vrot.slane %v693, 4
    %v717 = vadd.f32 %v693, %v716
    %v718 = vrot.slane %v717, 2
    %v719 = vadd.f32 %v717, %v718
    %v720 = vrot.slane %v719, 1
    %v721 = vadd.f32 %v719, %v720
    %v722 = vrot.slane %v694, 4
    %v723 = vadd.f32 %v694, %v722
    %v724 = vrot.slane %v723, 2
    %v725 = vadd.f32 %v723, %v724
    %v726 = vrot.slane %v725, 1
    %v727 = vadd.f32 %v725, %v726
    %v728 = vrot.slane %v695, 4
    %v729 = vadd.f32 %v695, %v728
    %v730 = vrot.slane %v729, 2
    %v731 = vadd.f32 %v729, %v730
    %v732 = vrot.slane %v731, 1
    %v733 = vadd.f32 %v731, %v732
    %v734 = vrot.slane %v696, 4
    %v735 = vadd.f32 %v696, %v734
    %v736 = vrot.slane %v735, 2
    %v737 = vadd.f32 %v735, %v736
    %v738 = vrot.slane %v737, 1
    %v739 = vadd.f32 %v737, %v738
    %v740 = vrot.slane %v697, 4
    %v741 = vadd.f32 %v697, %v740
    %v742 = vrot.slane %v741, 2
    %v743 = vadd.f32 %v741, %v742
    %v744 = vrot.slane %v743, 1
    %v745 = vadd.f32 %v743, %v744
    %vm754 = vcmask 1041409
    %v755 = vsel %vm754, %v709, %v703
    %vm756 = vcmask 1042434
    %v757 = vsel %vm756, %v715, %v755
    %vm758 = vcmask 1043459
    %v759 = vsel %vm758, %v721, %v757
    %vm760 = vcmask 1044484
    %v761 = vsel %vm760, %v727, %v759
    %vm762 = vcmask 1045509
    %v763 = vsel %vm762, %v733, %v761
    %vm764 = vcmask 1046534
    %v765 = vsel %vm764, %v739, %v763
    %vm766 = vcmask 1047559
    %v767 = vsel %vm766, %v745, %v765
    %769 = vmatpush.xpose.msra.mxu0 0.0
    %770 = vmatpush.xpose.msra.mxu0 0.0
    %771 = vmatpush.xpose.msra.mxu0 0.0
    %772 = vmatpush.xpose.msra.mxu0 0.0
    %773 = vmatpush.xpose.msra.mxu0 0.0
    %774 = vmatpush.xpose.msra.mxu0 0.0
    %775 = vmatpush.xpose.msra.mxu0 0.0
    %776 = vmatpush.xpose.msra.mxu0 0.0
    %777 = vmatpush.xpose.msra.mxu0 0.0
    %778 = vmatpush.xpose.msra.mxu0 0.0
    %779 = vmatpush.xpose.msra.mxu0 0.0
    %780 = vmatpush.xpose.msra.mxu0 0.0
    %781 = vmatpush.xpose.msra.mxu0 0.0
    %782 = vmatpush.xpose.msra.mxu0 0.0
    %783 = vmatpush.xpose.msra.mxu0 0.0
    %784 = vmatpush.xpose.msra.mxu0 %v767
    %785 = vmatmul.f32.gmra.mxu0 %v214
    %v786 = vpop.f32.mrf.mxu0
    %v787 = vadd.f32 0.0, %v786
    %788 = vdwg.mxu0
    %v789 = vmul.f32 %v787, 0.125
    %vm790 = vcmask 57344
    %791 = vst.msk [vmem:[#allocation5] sm:$0x1] %vm790, %v789
    // Predicated region
    $region22: #{tpu_custom_call.1} parent=1 // pred_check
      _
    $region23: #{tpu_custom_call.1} parent=1 // pred_check_branch
      %793 = sbr.rel (0) target = $region25
    $region24: #{tpu_custom_call.1} parent=1 // pred_region
      %795 = vsyncadd [#allocation4], 0
      %s797 = sshll.u32 [#allocation5], 4
      %s798 = int_to_ptr.vmem [resolvable:$true] %s797
      %s799 = sshll.u32 %s4, 4
      %s800 = int_to_ptr.hbm [resolvable:$true] %s799
      %802 = dma.vmem_to_hbm [thread:$0]  %s798, 16, %s800, [#allocation4]
    $region25: #{tpu_custom_call.1} parent=1 // pred_fallthru
      _
    // Predicated region
    $region26: #{tpu_custom_call.1} parent=1 // pred_check
      _
    $region27: #{tpu_custom_call.1} parent=1 // pred_check_branch
      %804 = sbr.rel (0) target = $region29
    $region28: #{tpu_custom_call.1} parent=1 // pred_region
      %806 = dma.done [#allocation4], 16
    $region29: #{tpu_custom_call.1} parent=1 // pred_fallthru
      _
    %807 = vsyncpa [#allocation3], 1
    %808 = vsyncpa [#allocation4], 1

</llo_original>
